<compile_context>
chip_gen: v5e
topology: v5e:2x2
jax: 0.10.0
libtpu: 0.0.40
codegen_flags: <defaults>
</compile_context>

<pallas_src>
import functools
import math

import jax
import jax.numpy as jnp
import numpy as np
from jax.experimental import pallas as pl
from jax.experimental.pallas import tpu as pltpu


def _atan_f32(x):
    """float32 arctan from VPU-only ops (Cephes atanf reduction + polynomial)."""
    sign = jnp.where(x < 0.0, -1.0, 1.0).astype(x.dtype)
    ax = jnp.abs(x)
    big = ax > 2.414213562373095            # tan(3*pi/8)
    mid = jnp.logical_and(ax > 0.4142135623730951, jnp.logical_not(big))
    safe = jnp.maximum(ax, 1e-30)           # keep the unused branch finite
    xr = jnp.where(big, -1.0 / safe, jnp.where(mid, (ax - 1.0) / (ax + 1.0), ax))
    y0 = jnp.where(big, math.pi / 2.0,
                   jnp.where(mid, math.pi / 4.0, 0.0)).astype(x.dtype)
    z = xr * xr
    p = ((8.05374449538e-2 * z - 1.38776856032e-1) * z
         + 1.99777106478e-1) * z - 3.33329491539e-1
    return sign * (y0 + p * z * xr + xr)


def _difftopk_kernel(x_ref, out_ref, alpha_ref, *, n, steepness, distribution):
    # x_ref     : (TB, n_pad)     scores for TB batch rows (size on the lanes)
    # out_ref   : (k, TB, n_pad)  out[c, b, i] = P_b[i, n-k+c]
    # alpha_ref : (L, TB, n_pad)  per-layer mixing weights (L == n layers)
    TB, n_pad = x_ref.shape
    k = out_ref.shape[0]
    L = alpha_ref.shape[0]
    npairs = L // 2
    odd_tail = (L % 2) == 1

    # ---- hoisted lane-index constants -----------------------------------
    lane = jax.lax.broadcasted_iota(jnp.int32, (TB, n_pad), 1)
    even = (lane & 1) == 0
    s_un = jnp.where(even, 1.0, -1.0).astype(jnp.float32)   # unshifted signs
    s_sh = -s_un                                            # shifted signs
    if n % 2 == 1:
        fx_un = lane == (n - 1)          # unpaired lane in unshifted layers
        fx_sh = lane == 0                # unpaired lane in shifted layers
    else:
        fx_un = lane < 0                 # none
        fx_sh = jnp.logical_or(lane == 0, lane == (n - 1))

    def lane_roll(a, shift):
        # roll along the minor (lane) axis; 3-D operands are flattened to 2-D
        # (leading dims merge into the 8-aligned sublane dim -> free reshape).
        if a.ndim == 2:
            return pltpu.roll(a, shift, 1)
        kk, tb, npad = a.shape
        a2 = a.reshape(kk * tb, npad)
        return pltpu.roll(a2, shift, 1).reshape(kk, tb, npad)

    def partner(a, parity):
        """a[..., j] -> a[..., partner_parity(j)] (adjacent-pair gather)."""
        npad = a.shape[-1]
        up = lane_roll(a, npad - 1)      # up[..., j]   = a[..., j+1]
        down = lane_roll(a, 1)           # down[..., j] = a[..., j-1]
        lo, hi = (up, down) if parity == 0 else (down, up)
        mask = even if a.ndim == 2 else even[None]
        return jnp.where(mask, lo, hi)

    def alpha_fn(v):
        if distribution == 'cauchy':
            return _atan_f32(v) * (1.0 / math.pi) + 0.5
        if distribution == 'logistic':
            return jax.nn.sigmoid(v)
        # TODO(synk): 'logistic_phi' / 'gaussian' / 'reciprocal' / 'optimal'
        raise NotImplementedError(distribution)

    def fwd_layer(x, parity):
        xp = partner(x, parity)
        s = s_un if parity == 0 else s_sh
        fx = fx_un if parity == 0 else fx_sh
        a = alpha_fn(steepness * s * (xp - x))
        a = jnp.where(fx, 1.0, a)        # fixed (unpaired) lanes pass through
        return a * x + (1.0 - a) * xp, a

    # ---- forward sweep: run the network on x, record the alphas ---------
    def fwd_pair(p, x):
        idx = pl.multiple_of(2 * p, 2)
        x, a0 = fwd_layer(x, 0)
        alpha_ref[idx] = a0
        x, a1 = fwd_layer(x, 1)
        alpha_ref[idx + 1] = a1
        return x

    x = jax.lax.fori_loop(0, npairs, fwd_pair, x_ref[...])
    if odd_tail:
        _, a_last = fwd_layer(x, 0)      # layer L-1 is even-indexed (unshifted)
        alpha_ref[L - 1] = a_last

    # ---- reverse sweep: carry only the k needed columns of P ------------
    # bt[c, b, j] = (M_l ... M_{L-1} @ I[:, n-k:])[j, c]
    bt = jnp.stack(
        [jnp.where(lane == (n - k + c), 1.0, 0.0) for c in range(k)],
        axis=0).astype(jnp.float32)      # (k, TB, n_pad)

    def bwd_layer(bt, a, parity):
        ap = partner(a, parity)                       # alpha at partner lane
        fx = fx_un if parity == 0 else fx_sh
        w = jnp.where(fx, 0.0, 1.0 - ap)              # partner-row weight
        btp = partner(bt, parity)
        return a[None] * bt + w[None] * btp

    if odd_tail:
        bt = bwd_layer(bt, alpha_ref[L - 1], 0)

    def bwd_pair(i, bt):
        p = npairs - 1 - i
        idx = pl.multiple_of(2 * p, 2)
        bt = bwd_layer(bt, alpha_ref[idx + 1], 1)
        bt = bwd_layer(bt, alpha_ref[idx], 0)
        return bt

    bt = jax.lax.fori_loop(0, npairs, bwd_pair, bt)
    out_ref[...] = bt


def difftopk_forward(vectors, k, steepness=10.0, distribution='cauchy',
                     sorting_network_type='odd_even', block_b=8):
    """DiffTopkNet.forward: (batch, size) -> (batch, size, k)."""
    assert vectors.ndim == 2, vectors.shape
    # TODO(synk): 'bitonic' and sparse_* pruned networks are not implemented.
    assert sorting_network_type == 'odd_even', sorting_network_type
    B, n = vectors.shape
    assert 1 <= k <= n, (k, n)
    L = n                                        # odd-even network has n layers
    n_pad = ((n + 127) // 128) * 128             # lane axis multiple of 128
    TB = max(8, ((min(block_b, B) + 7) // 8) * 8)
    B_pad = ((B + TB - 1) // TB) * TB

    x = jnp.pad(vectors.astype(jnp.float32), ((0, B_pad - B), (0, n_pad - n)))

    # scratch + double-buffered in/out blocks, with headroom; <=48 MiB for v7x.
    est = 4 * TB * n_pad * (L + 2 + 2 * k) + (4 << 20)
    vmem_limit = int(min(max(est, 32 << 20), 48 << 20))

    kernel = functools.partial(_difftopk_kernel, n=n,
                               steepness=float(steepness),
                               distribution=distribution)
    out = pl.pallas_call(
        kernel,
        out_shape=jax.ShapeDtypeStruct((k, B_pad, n_pad), jnp.float32),
        grid_spec=pltpu.PrefetchScalarGridSpec(
            num_scalar_prefetch=0,
            grid=(B_pad // TB,),
            in_specs=[pl.BlockSpec((TB, n_pad), lambda b: (b, 0))],
            out_specs=pl.BlockSpec((k, TB, n_pad), lambda b: (0, b, 0)),
            scratch_shapes=[pltpu.VMEM((L, TB, n_pad), jnp.float32)],
        ),
        compiler_params=pltpu.CompilerParams(
            dimension_semantics=("parallel",),
            vmem_limit_bytes=vmem_limit,
        ),
    )(x)
    # (k, B_pad, n_pad) -> (B, n, k)
    return jnp.transpose(out[:, :B, :n], (1, 2, 0))


# --------------------------- pure-numpy reference ----------------------------
def build_odd_even_network(n):
    layers = n
    S = np.ones((layers, n), dtype=np.float64)
    partners = np.tile(np.arange(n), (layers, 1))
    for l in range(layers):
        for i in range(l % 2, n - 1, 2):
            partners[l, i] = i + 1
            partners[l, i + 1] = i
            S[l, i] = 1.0          # lower index of the pair gets the soft-min
            S[l, i + 1] = -1.0     # upper index gets the soft-max
    return partners, S


def difftopk_reference(vectors, k, steepness=10.0, distribution='cauchy'):
    x = np.asarray(vectors, dtype=np.float64)
    B, n = x.shape
    partners, S = build_odd_even_network(n)
    P = np.broadcast_to(np.eye(n), (B, n, n)).copy()
    for l in range(n):
        idx = partners[l]
        s = S[l][None, :]
        xp = x[:, idx]
        v = steepness * s * (xp - x)
        if distribution == 'cauchy':
            alpha = np.arctan(v) / np.pi + 0.5
        else:
            alpha = 1.0 / (1.0 + np.exp(-v))
        P = alpha[:, None, :] * P + (1.0 - alpha)[:, None, :] * P[:, :, idx]
        x = alpha * x + (1.0 - alpha) * xp
    return P[:, :, n - k:]


if __name__ == "__main__":
    key0, key1 = jax.random.split(jax.random.PRNGKey(0))

    # DiffTopkNet('odd_even', size=8, k=3), batch of 4.
    B, size, k = 4, 8, 3
    vectors = jax.random.normal(key0, (B, size), dtype=jnp.float32)
    out = jax.block_until_ready(difftopk_forward(vectors, k=k, steepness=10.0))
    assert out.shape == (B, size, k), out.shape
    ref = difftopk_reference(np.asarray(vectors), k=k, steepness=10.0)
    np.testing.assert_allclose(np.asarray(out), ref, atol=1e-3, rtol=1e-3)

    # Odd size exercises the unpaired-lane / odd-layer-count path.
    B2, size2, k2 = 2, 5, 2
    v2 = jax.random.normal(key1, (B2, size2), dtype=jnp.float32)
    out2 = jax.block_until_ready(difftopk_forward(v2, k=k2, steepness=10.0))
    ref2 = difftopk_reference(np.asarray(v2), k=k2, steepness=10.0)
    np.testing.assert_allclose(np.asarray(out2), ref2, atol=1e-3, rtol=1e-3)

    print("KERNEL_OK")
</pallas_src>

<mosaic_0001>
module attributes {stable_mosaic.version = 11 : i64} {
  func.func @_difftopk_kernel(%arg0: i32, %arg1: memref<8x128xf32, #tpu.memory_space<vmem>>, %arg2: memref<3x8x128xf32, #tpu.memory_space<vmem>>, %arg3: memref<8x8x128xf32, #tpu.memory_space<vmem>>) attributes {dimension_semantics = [#tpu.dimension_semantics<parallel>], iteration_bounds = array<i64: 1>, scalar_prefetch = 0 : i64, scratch_operands = 1 : i64, tpu.core_type = #tpu.core_type<tc>, window_params = [{transform_indices = @transform_0, window_bounds = array<i64: 8, 128>}, {transform_indices = @transform_1, window_bounds = array<i64: 3, 8, 128>}]} {
    %0 = tpu.iota {dimensions = array<i32: 1>} : vector<8x128xi32>
    %c1_i32 = arith.constant 1 : i32
    %1 = vector.broadcast %c1_i32 : i32 to vector<8x128xi32>
    %2 = arith.andi %0, %1 : vector<8x128xi32>
    %c0_i32 = arith.constant 0 : i32
    %3 = vector.broadcast %c0_i32 : i32 to vector<8x128xi32>
    %4 = arith.cmpi eq, %2, %3 : vector<8x128xi32>
    %cst = arith.constant 1.000000e+00 : f32
    %cst_0 = arith.constant -1.000000e+00 : f32
    %5 = vector.broadcast %cst : f32 to vector<8x128xf32>
    %6 = vector.broadcast %cst_0 : f32 to vector<8x128xf32>
    %7 = arith.select %4, %5, %6 : vector<8x128xi1>, vector<8x128xf32>
    %cst_1 = arith.constant 0.000000e+00 : f32
    %8 = vector.broadcast %cst_1 : f32 to vector<8x128xf32>
    %9 = arith.subf %8, %7 : vector<8x128xf32>
    %c0_i32_2 = arith.constant 0 : i32
    %10 = vector.broadcast %c0_i32_2 : i32 to vector<8x128xi32>
    %11 = arith.cmpi slt, %0, %10 : vector<8x128xi32>
    %c0_i32_3 = arith.constant 0 : i32
    %12 = vector.broadcast %c0_i32_3 : i32 to vector<8x128xi32>
    %13 = arith.cmpi eq, %0, %12 : vector<8x128xi32>
    %c7_i32 = arith.constant 7 : i32
    %14 = vector.broadcast %c7_i32 : i32 to vector<8x128xi32>
    %15 = arith.cmpi eq, %0, %14 : vector<8x128xi32>
    %16 = arith.ori %13, %15 : vector<8x128xi1>
    %c0 = arith.constant 0 : index
    %c0_4 = arith.constant 0 : index
    %17 = vector.load %arg1[%c0, %c0_4] : memref<8x128xf32, #tpu.memory_space<vmem>>, vector<8x128xf32>
    %c0_i32_5 = arith.constant 0 : i32
    %c4_i32 = arith.constant 4 : i32
    %18 = arith.addi %c0_i32_5, %c4_i32 : i32
    %c1_i32_6 = arith.constant 1 : i32
    %19 = scf.for %arg4 = %c0_i32_5 to %18 step %c1_i32_6 iter_args(%arg5 = %17) -> (vector<8x128xf32>)  : i32 {
      %c2_i32 = arith.constant 2 : i32
      %42 = arith.muli %c2_i32, %arg4 : i32
      %43 = tpu.assume_multiple %42, 2 : i32
      %c127_i32 = arith.constant 127 : i32
      %44 = tpu.dynamic_rotate %arg5 by %c127_i32 dim 1 : vector<8x128xf32>, i32 -> vector<8x128xf32>
      %c1_i32_22 = arith.constant 1 : i32
      %45 = tpu.dynamic_rotate %arg5 by %c1_i32_22 dim 1 : vector<8x128xf32>, i32 -> vector<8x128xf32>
      %46 = arith.select %4, %44, %45 : vector<8x128xi1>, vector<8x128xf32>
      %cst_23 = arith.constant 1.000000e+01 : f32
      %47 = vector.broadcast %cst_23 : f32 to vector<8x128xf32>
      %48 = arith.mulf %47, %7 : vector<8x128xf32>
      %49 = arith.subf %46, %arg5 : vector<8x128xf32>
      %50 = arith.mulf %48, %49 : vector<8x128xf32>
      %cst_24 = arith.constant 0.000000e+00 : f32
      %51 = vector.broadcast %cst_24 : f32 to vector<8x128xf32>
      %52 = arith.cmpf olt, %50, %51 : vector<8x128xf32>
      %cst_25 = arith.constant -1.000000e+00 : f32
      %cst_26 = arith.constant 1.000000e+00 : f32
      %53 = vector.broadcast %cst_25 : f32 to vector<8x128xf32>
      %54 = vector.broadcast %cst_26 : f32 to vector<8x128xf32>
      %55 = arith.select %52, %53, %54 : vector<8x128xi1>, vector<8x128xf32>
      %56 = math.absf %50 : vector<8x128xf32>
      %cst_27 = arith.constant 2.41421366 : f32
      %57 = vector.broadcast %cst_27 : f32 to vector<8x128xf32>
      %58 = arith.cmpf ogt, %56, %57 : vector<8x128xf32>
      %cst_28 = arith.constant 0.414213568 : f32
      %59 = vector.broadcast %cst_28 : f32 to vector<8x128xf32>
      %60 = arith.cmpf ogt, %56, %59 : vector<8x128xf32>
      %cst_29 = arith.constant dense<true> : vector<8x128xi1>
      %61 = arith.xori %58, %cst_29 : vector<8x128xi1>
      %62 = arith.andi %60, %61 : vector<8x128xi1>
      %cst_30 = arith.constant 1.000000e-30 : f32
      %63 = vector.broadcast %cst_30 : f32 to vector<8x128xf32>
      %64 = arith.maximumf %56, %63 : vector<8x128xf32>
      %cst_31 = arith.constant -1.000000e+00 : f32
      %65 = vector.broadcast %cst_31 : f32 to vector<8x128xf32>
      %66 = arith.divf %65, %64 : vector<8x128xf32>
      %cst_32 = arith.constant 1.000000e+00 : f32
      %67 = vector.broadcast %cst_32 : f32 to vector<8x128xf32>
      %68 = arith.subf %56, %67 : vector<8x128xf32>
      %cst_33 = arith.constant 1.000000e+00 : f32
      %69 = vector.broadcast %cst_33 : f32 to vector<8x128xf32>
      %70 = arith.addf %56, %69 : vector<8x128xf32>
      %71 = arith.divf %68, %70 : vector<8x128xf32>
      %72 = arith.select %62, %71, %56 : vector<8x128xi1>, vector<8x128xf32>
      %73 = arith.select %58, %66, %72 : vector<8x128xi1>, vector<8x128xf32>
      %cst_34 = arith.constant 0.785398185 : f32
      %cst_35 = arith.constant 0.000000e+00 : f32
      %74 = vector.broadcast %cst_34 : f32 to vector<8x128xf32>
      %75 = vector.broadcast %cst_35 : f32 to vector<8x128xf32>
      %76 = arith.select %62, %74, %75 : vector<8x128xi1>, vector<8x128xf32>
      %cst_36 = arith.constant 1.57079637 : f32
      %77 = vector.broadcast %cst_36 : f32 to vector<8x128xf32>
      %78 = arith.select %58, %77, %76 : vector<8x128xi1>, vector<8x128xf32>
      %79 = arith.mulf %73, %73 : vector<8x128xf32>
      %cst_37 = arith.constant 0.0805374458 : f32
      %80 = vector.broadcast %cst_37 : f32 to vector<8x128xf32>
      %81 = arith.mulf %80, %79 : vector<8x128xf32>
      %cst_38 = arith.constant 0.138776854 : f32
      %82 = vector.broadcast %cst_38 : f32 to vector<8x128xf32>
      %83 = arith.subf %81, %82 : vector<8x128xf32>
      %84 = arith.mulf %83, %79 : vector<8x128xf32>
      %cst_39 = arith.constant 0.199777111 : f32
      %85 = vector.broadcast %cst_39 : f32 to vector<8x128xf32>
      %86 = arith.addf %84, %85 : vector<8x128xf32>
      %87 = arith.mulf %86, %79 : vector<8x128xf32>
      %cst_40 = arith.constant 0.333329499 : f32
      %88 = vector.broadcast %cst_40 : f32 to vector<8x128xf32>
      %89 = arith.subf %87, %88 : vector<8x128xf32>
      %90 = arith.mulf %89, %79 : vector<8x128xf32>
      %91 = arith.mulf %90, %73 : vector<8x128xf32>
      %92 = arith.addf %78, %91 : vector<8x128xf32>
      %93 = arith.addf %92, %73 : vector<8x128xf32>
      %94 = arith.mulf %55, %93 : vector<8x128xf32>
      %cst_41 = arith.constant 0.318309873 : f32
      %95 = vector.broadcast %cst_41 : f32 to vector<8x128xf32>
      %96 = arith.mulf %94, %95 : vector<8x128xf32>
      %cst_42 = arith.constant 5.000000e-01 : f32
      %97 = vector.broadcast %cst_42 : f32 to vector<8x128xf32>
      %98 = arith.addf %96, %97 : vector<8x128xf32>
      %cst_43 = arith.constant 1.000000e+00 : f32
      %99 = vector.broadcast %cst_43 : f32 to vector<8x128xf32>
      %100 = arith.select %11, %99, %98 : vector<8x128xi1>, vector<8x128xf32>
      %101 = arith.mulf %100, %arg5 : vector<8x128xf32>
      %cst_44 = arith.constant 1.000000e+00 : f32
      %102 = vector.broadcast %cst_44 : f32 to vector<8x128xf32>
      %103 = arith.subf %102, %100 : vector<8x128xf32>
      %104 = arith.mulf %103, %46 : vector<8x128xf32>
      %105 = arith.addf %101, %104 : vector<8x128xf32>
      %106 = arith.index_cast %43 : i32 to index
      %c0_45 = arith.constant 0 : index
      %c0_46 = arith.constant 0 : index
      %107 = vector.load %arg3[%106, %c0_45, %c0_46] : memref<8x8x128xf32, #tpu.memory_space<vmem>>, vector<1x8x128xf32>
      %108 = vector.shape_cast %107 : vector<1x8x128xf32> to vector<8x128xf32>
      %109 = vector.shape_cast %100 : vector<8x128xf32> to vector<1x8x128xf32>
      tpu.vector_store %arg3[%106, %c0_45, %c0_46], %109 {strides = array<i32>} : memref<8x8x128xf32, #tpu.memory_space<vmem>>, vector<1x8x128xf32>,
      %c127_i32_47 = arith.constant 127 : i32
      %110 = tpu.dynamic_rotate %105 by %c127_i32_47 dim 1 : vector<8x128xf32>, i32 -> vector<8x128xf32>
      %c1_i32_48 = arith.constant 1 : i32
      %111 = tpu.dynamic_rotate %105 by %c1_i32_48 dim 1 : vector<8x128xf32>, i32 -> vector<8x128xf32>
      %112 = arith.select %4, %111, %110 : vector<8x128xi1>, vector<8x128xf32>
      %cst_49 = arith.constant 1.000000e+01 : f32
      %113 = vector.broadcast %cst_49 : f32 to vector<8x128xf32>
      %114 = arith.mulf %113, %9 : vector<8x128xf32>
      %115 = arith.subf %112, %105 : vector<8x128xf32>
      %116 = arith.mulf %114, %115 : vector<8x128xf32>
      %cst_50 = arith.constant 0.000000e+00 : f32
      %117 = vector.broadcast %cst_50 : f32 to vector<8x128xf32>
      %118 = arith.cmpf olt, %116, %117 : vector<8x128xf32>
      %cst_51 = arith.constant -1.000000e+00 : f32
      %cst_52 = arith.constant 1.000000e+00 : f32
      %119 = vector.broadcast %cst_51 : f32 to vector<8x128xf32>
      %120 = vector.broadcast %cst_52 : f32 to vector<8x128xf32>
      %121 = arith.select %118, %119, %120 : vector<8x128xi1>, vector<8x128xf32>
      %122 = math.absf %116 : vector<8x128xf32>
      %cst_53 = arith.constant 2.41421366 : f32
      %123 = vector.broadcast %cst_53 : f32 to vector<8x128xf32>
      %124 = arith.cmpf ogt, %122, %123 : vector<8x128xf32>
      %cst_54 = arith.constant 0.414213568 : f32
      %125 = vector.broadcast %cst_54 : f32 to vector<8x128xf32>
      %126 = arith.cmpf ogt, %122, %125 : vector<8x128xf32>
      %cst_55 = arith.constant dense<true> : vector<8x128xi1>
      %127 = arith.xori %124, %cst_55 : vector<8x128xi1>
      %128 = arith.andi %126, %127 : vector<8x128xi1>
      %cst_56 = arith.constant 1.000000e-30 : f32
      %129 = vector.broadcast %cst_56 : f32 to vector<8x128xf32>
      %130 = arith.maximumf %122, %129 : vector<8x128xf32>
      %cst_57 = arith.constant -1.000000e+00 : f32
      %131 = vector.broadcast %cst_57 : f32 to vector<8x128xf32>
      %132 = arith.divf %131, %130 : vector<8x128xf32>
      %cst_58 = arith.constant 1.000000e+00 : f32
      %133 = vector.broadcast %cst_58 : f32 to vector<8x128xf32>
      %134 = arith.subf %122, %133 : vector<8x128xf32>
      %cst_59 = arith.constant 1.000000e+00 : f32
      %135 = vector.broadcast %cst_59 : f32 to vector<8x128xf32>
      %136 = arith.addf %122, %135 : vector<8x128xf32>
      %137 = arith.divf %134, %136 : vector<8x128xf32>
      %138 = arith.select %128, %137, %122 : vector<8x128xi1>, vector<8x128xf32>
      %139 = arith.select %124, %132, %138 : vector<8x128xi1>, vector<8x128xf32>
      %cst_60 = arith.constant 0.785398185 : f32
      %cst_61 = arith.constant 0.000000e+00 : f32
      %140 = vector.broadcast %cst_60 : f32 to vector<8x128xf32>
      %141 = vector.broadcast %cst_61 : f32 to vector<8x128xf32>
      %142 = arith.select %128, %140, %141 : vector<8x128xi1>, vector<8x128xf32>
      %cst_62 = arith.constant 1.57079637 : f32
      %143 = vector.broadcast %cst_62 : f32 to vector<8x128xf32>
      %144 = arith.select %124, %143, %142 : vector<8x128xi1>, vector<8x128xf32>
      %145 = arith.mulf %139, %139 : vector<8x128xf32>
      %cst_63 = arith.constant 0.0805374458 : f32
      %146 = vector.broadcast %cst_63 : f32 to vector<8x128xf32>
      %147 = arith.mulf %146, %145 : vector<8x128xf32>
      %cst_64 = arith.constant 0.138776854 : f32
      %148 = vector.broadcast %cst_64 : f32 to vector<8x128xf32>
      %149 = arith.subf %147, %148 : vector<8x128xf32>
      %150 = arith.mulf %149, %145 : vector<8x128xf32>
      %cst_65 = arith.constant 0.199777111 : f32
      %151 = vector.broadcast %cst_65 : f32 to vector<8x128xf32>
      %152 = arith.addf %150, %151 : vector<8x128xf32>
      %153 = arith.mulf %152, %145 : vector<8x128xf32>
      %cst_66 = arith.constant 0.333329499 : f32
      %154 = vector.broadcast %cst_66 : f32 to vector<8x128xf32>
      %155 = arith.subf %153, %154 : vector<8x128xf32>
      %156 = arith.mulf %155, %145 : vector<8x128xf32>
      %157 = arith.mulf %156, %139 : vector<8x128xf32>
      %158 = arith.addf %144, %157 : vector<8x128xf32>
      %159 = arith.addf %158, %139 : vector<8x128xf32>
      %160 = arith.mulf %121, %159 : vector<8x128xf32>
      %cst_67 = arith.constant 0.318309873 : f32
      %161 = vector.broadcast %cst_67 : f32 to vector<8x128xf32>
      %162 = arith.mulf %160, %161 : vector<8x128xf32>
      %cst_68 = arith.constant 5.000000e-01 : f32
      %163 = vector.broadcast %cst_68 : f32 to vector<8x128xf32>
      %164 = arith.addf %162, %163 : vector<8x128xf32>
      %cst_69 = arith.constant 1.000000e+00 : f32
      %165 = vector.broadcast %cst_69 : f32 to vector<8x128xf32>
      %166 = arith.select %16, %165, %164 : vector<8x128xi1>, vector<8x128xf32>
      %167 = arith.mulf %166, %105 : vector<8x128xf32>
      %cst_70 = arith.constant 1.000000e+00 : f32
      %168 = vector.broadcast %cst_70 : f32 to vector<8x128xf32>
      %169 = arith.subf %168, %166 : vector<8x128xf32>
      %170 = arith.mulf %169, %112 : vector<8x128xf32>
      %171 = arith.addf %167, %170 : vector<8x128xf32>
      %c1_i32_71 = arith.constant 1 : i32
      %172 = arith.addi %43, %c1_i32_71 : i32
      %173 = arith.index_cast %172 : i32 to index
      %c0_72 = arith.constant 0 : index
      %c0_73 = arith.constant 0 : index
      %174 = vector.load %arg3[%173, %c0_72, %c0_73] : memref<8x8x128xf32, #tpu.memory_space<vmem>>, vector<1x8x128xf32>
      %175 = vector.shape_cast %174 : vector<1x8x128xf32> to vector<8x128xf32>
      %176 = vector.shape_cast %166 : vector<8x128xf32> to vector<1x8x128xf32>
      tpu.vector_store %arg3[%173, %c0_72, %c0_73], %176 {strides = array<i32>} : memref<8x8x128xf32, #tpu.memory_space<vmem>>, vector<1x8x128xf32>,
      scf.yield %171 : vector<8x128xf32>
    }
    %c4_i32_7 = arith.constant 4 : i32
    %c5_i32 = arith.constant 5 : i32
    %20 = vector.broadcast %c5_i32 : i32 to vector<8x128xi32>
    %21 = arith.cmpi eq, %0, %20 : vector<8x128xi32>
    %cst_8 = arith.constant 1.000000e+00 : f32
    %cst_9 = arith.constant 0.000000e+00 : f32
    %22 = vector.broadcast %cst_8 : f32 to vector<8x128xf32>
    %23 = vector.broadcast %cst_9 : f32 to vector<8x128xf32>
    %24 = arith.select %21, %22, %23 : vector<8x128xi1>, vector<8x128xf32>
    %c6_i32 = arith.constant 6 : i32
    %25 = vector.broadcast %c6_i32 : i32 to vector<8x128xi32>
    %26 = arith.cmpi eq, %0, %25 : vector<8x128xi32>
    %cst_10 = arith.constant 1.000000e+00 : f32
    %cst_11 = arith.constant 0.000000e+00 : f32
    %27 = vector.broadcast %cst_10 : f32 to vector<8x128xf32>
    %28 = vector.broadcast %cst_11 : f32 to vector<8x128xf32>
    %29 = arith.select %26, %27, %28 : vector<8x128xi1>, vector<8x128xf32>
    %c7_i32_12 = arith.constant 7 : i32
    %30 = vector.broadcast %c7_i32_12 : i32 to vector<8x128xi32>
    %31 = arith.cmpi eq, %0, %30 : vector<8x128xi32>
    %cst_13 = arith.constant 1.000000e+00 : f32
    %cst_14 = arith.constant 0.000000e+00 : f32
    %32 = vector.broadcast %cst_13 : f32 to vector<8x128xf32>
    %33 = vector.broadcast %cst_14 : f32 to vector<8x128xf32>
    %34 = arith.select %31, %32, %33 : vector<8x128xi1>, vector<8x128xf32>
    %35 = vector.shape_cast %24 : vector<8x128xf32> to vector<1x8x128xf32>
    %36 = vector.shape_cast %29 : vector<8x128xf32> to vector<1x8x128xf32>
    %37 = vector.shape_cast %34 : vector<8x128xf32> to vector<1x8x128xf32>
    %38 = tpu.concatenate %35, %36, %37 in 0 : vector<1x8x128xf32>, vector<1x8x128xf32>, vector<1x8x128xf32> -> vector<3x8x128xf32>
    %c0_i32_15 = arith.constant 0 : i32
    %c4_i32_16 = arith.constant 4 : i32
    %39 = arith.addi %c0_i32_15, %c4_i32_16 : i32
    %c1_i32_17 = arith.constant 1 : i32
    %40 = scf.for %arg4 = %c0_i32_15 to %39 step %c1_i32_17 iter_args(%arg5 = %38) -> (vector<3x8x128xf32>)  : i32 {
      %c3_i32 = arith.constant 3 : i32
      %42 = arith.subi %c3_i32, %arg4 : i32
      %c2_i32 = arith.constant 2 : i32
      %43 = arith.muli %c2_i32, %42 : i32
      %44 = tpu.assume_multiple %43, 2 : i32
      %c1_i32_22 = arith.constant 1 : i32
      %45 = arith.addi %44, %c1_i32_22 : i32
      %46 = arith.index_cast %45 : i32 to index
      %c0_23 = arith.constant 0 : index
      %c0_24 = arith.constant 0 : index
      %47 = vector.load %arg3[%46, %c0_23, %c0_24] : memref<8x8x128xf32, #tpu.memory_space<vmem>>, vector<1x8x128xf32>
      %48 = vector.shape_cast %47 : vector<1x8x128xf32> to vector<8x128xf32>
      %c127_i32 = arith.constant 127 : i32
      %49 = tpu.dynamic_rotate %48 by %c127_i32 dim 1 : vector<8x128xf32>, i32 -> vector<8x128xf32>
      %c1_i32_25 = arith.constant 1 : i32
      %50 = tpu.dynamic_rotate %48 by %c1_i32_25 dim 1 : vector<8x128xf32>, i32 -> vector<8x128xf32>
      %51 = arith.select %4, %50, %49 : vector<8x128xi1>, vector<8x128xf32>
      %cst_26 = arith.constant 1.000000e+00 : f32
      %52 = vector.broadcast %cst_26 : f32 to vector<8x128xf32>
      %53 = arith.subf %52, %51 : vector<8x128xf32>
      %cst_27 = arith.constant 0.000000e+00 : f32
      %54 = vector.broadcast %cst_27 : f32 to vector<8x128xf32>
      %55 = arith.select %16, %54, %53 : vector<8x128xi1>, vector<8x128xf32>
      %56 = vector.shape_cast %arg5 : vector<3x8x128xf32> to vector<24x128xf32>
      %c127_i32_28 = arith.constant 127 : i32
      %57 = tpu.dynamic_rotate %56 by %c127_i32_28 dim 1 : vector<24x128xf32>, i32 -> vector<24x128xf32>
      %58 = vector.shape_cast %57 : vector<24x128xf32> to vector<3x8x128xf32>
      %59 = vector.shape_cast %arg5 : vector<3x8x128xf32> to vector<24x128xf32>
      %c1_i32_29 = arith.constant 1 : i32
      %60 = tpu.dynamic_rotate %59 by %c1_i32_29 dim 1 : vector<24x128xf32>, i32 -> vector<24x128xf32>
      %61 = vector.shape_cast %60 : vector<24x128xf32> to vector<3x8x128xf32>
      %62 = vector.shape_cast %4 : vector<8x128xi1> to vector<1x8x128xi1>
      %63 = vector.shape_cast %62 : vector<1x8x128xi1> to vector<1x8x128xi1>
      %64 = vector.broadcast %63 : vector<1x8x128xi1> to vector<3x8x128xi1>
      %65 = arith.select %64, %61, %58 : vector<3x8x128xi1>, vector<3x8x128xf32>
      %66 = vector.shape_cast %48 : vector<8x128xf32> to vector<1x8x128xf32>
      %67 = vector.broadcast %66 : vector<1x8x128xf32> to vector<3x8x128xf32>
      %68 = arith.mulf %67, %arg5 : vector<3x8x128xf32>
      %69 = vector.shape_cast %55 : vector<8x128xf32> to vector<1x8x128xf32>
      %70 = vector.broadcast %69 : vector<1x8x128xf32> to vector<3x8x128xf32>
      %71 = arith.mulf %70, %65 : vector<3x8x128xf32>
      %72 = arith.addf %68, %71 : vector<3x8x128xf32>
      %73 = arith.index_cast %44 : i32 to index
      %c0_30 = arith.constant 0 : index
      %c0_31 = arith.constant 0 : index
      %74 = vector.load %arg3[%73, %c0_30, %c0_31] : memref<8x8x128xf32, #tpu.memory_space<vmem>>, vector<1x8x128xf32>
      %75 = vector.shape_cast %74 : vector<1x8x128xf32> to vector<8x128xf32>
      %c127_i32_32 = arith.constant 127 : i32
      %76 = tpu.dynamic_rotate %75 by %c127_i32_32 dim 1 : vector<8x128xf32>, i32 -> vector<8x128xf32>
      %c1_i32_33 = arith.constant 1 : i32
      %77 = tpu.dynamic_rotate %75 by %c1_i32_33 dim 1 : vector<8x128xf32>, i32 -> vector<8x128xf32>
      %78 = arith.select %4, %76, %77 : vector<8x128xi1>, vector<8x128xf32>
      %cst_34 = arith.constant 1.000000e+00 : f32
      %79 = vector.broadcast %cst_34 : f32 to vector<8x128xf32>
      %80 = arith.subf %79, %78 : vector<8x128xf32>
      %cst_35 = arith.constant 0.000000e+00 : f32
      %81 = vector.broadcast %cst_35 : f32 to vector<8x128xf32>
      %82 = arith.select %11, %81, %80 : vector<8x128xi1>, vector<8x128xf32>
      %83 = vector.shape_cast %72 : vector<3x8x128xf32> to vector<24x128xf32>
      %c127_i32_36 = arith.constant 127 : i32
      %84 = tpu.dynamic_rotate %83 by %c127_i32_36 dim 1 : vector<24x128xf32>, i32 -> vector<24x128xf32>
      %85 = vector.shape_cast %84 : vector<24x128xf32> to vector<3x8x128xf32>
      %86 = vector.shape_cast %72 : vector<3x8x128xf32> to vector<24x128xf32>
      %c1_i32_37 = arith.constant 1 : i32
      %87 = tpu.dynamic_rotate %86 by %c1_i32_37 dim 1 : vector<24x128xf32>, i32 -> vector<24x128xf32>
      %88 = vector.shape_cast %87 : vector<24x128xf32> to vector<3x8x128xf32>
      %89 = vector.shape_cast %4 : vector<8x128xi1> to vector<1x8x128xi1>
      %90 = vector.shape_cast %89 : vector<1x8x128xi1> to vector<1x8x128xi1>
      %91 = vector.broadcast %90 : vector<1x8x128xi1> to vector<3x8x128xi1>
      %92 = arith.select %91, %85, %88 : vector<3x8x128xi1>, vector<3x8x128xf32>
      %93 = vector.shape_cast %75 : vector<8x128xf32> to vector<1x8x128xf32>
      %94 = vector.broadcast %93 : vector<1x8x128xf32> to vector<3x8x128xf32>
      %95 = arith.mulf %94, %72 : vector<3x8x128xf32>
      %96 = vector.shape_cast %82 : vector<8x128xf32> to vector<1x8x128xf32>
      %97 = vector.broadcast %96 : vector<1x8x128xf32> to vector<3x8x128xf32>
      %98 = arith.mulf %97, %92 : vector<3x8x128xf32>
      %99 = arith.addf %95, %98 : vector<3x8x128xf32>
      scf.yield %99 : vector<3x8x128xf32>
    }
    %c4_i32_18 = arith.constant 4 : i32
    %c0_19 = arith.constant 0 : index
    %c0_20 = arith.constant 0 : index
    %c0_21 = arith.constant 0 : index
    %41 = vector.load %arg2[%c0_19, %c0_20, %c0_21] : memref<3x8x128xf32, #tpu.memory_space<vmem>>, vector<3x8x128xf32>
    tpu.vector_store %arg2[%c0_19, %c0_20, %c0_21], %40 {strides = array<i32>} : memref<3x8x128xf32, #tpu.memory_space<vmem>>, vector<3x8x128xf32>,
    return
  }
  func.func @transform_0(%arg0: i32) -> (i32, i32) {
    %c0_i32 = arith.constant 0 : i32
    %c0_i32_0 = arith.constant 0 : i32
    return %arg0, %c0_i32 : i32, i32
  }
  func.func @transform_1(%arg0: i32) -> (i32, i32, i32) {
    %c0_i32 = arith.constant 0 : i32
    %c0_i32_0 = arith.constant 0 : i32
    %c0_i32_1 = arith.constant 0 : i32
    return %c0_i32, %arg0, %c0_i32_0 : i32, i32, i32
  }
}

</mosaic_0001>

<llo_original>
// kernel: tpu_custom_call.1
$region0: #{tpu_custom_call.1}
  #allocation0 [shape = 'u32[]', space=smem, size = 0x4, offset = 0x4, fixed_abs, tag = 'smem constant byte address 0x4 - core index']
  #allocation1 [shape = 'u32[72,128]{1,0:T(1,128)}', space=vmem, size = 0x9000, scoped, tag = 'internal scratch']
  #allocation2 [shape = 'f32[8,8,128]{2,1,0:T(8,128)}', space=vmem, size = 0x8000, scoped, tag = 'scratch operand']
  %s0 = inlined_call_operand.hbm [shape: f32[8,128], index: 0, kind: input, shape index: {}]
  %s1 = inlined_call_operand.hbm [shape: f32[3,8,128], index: 1, kind: output, shape index: {}]
  %s2 = sld [smem:[#allocation0]]
  $region32: #{tpu_custom_call.1} parent=0
    _
  %s4 = ssub.s32 1, %s2
  %s5 = scalar_select 0, %s4, %s2
  $region1: #{tpu_custom_call.1} parent=0
    #allocation3 [shape = 'u8[4096]{0}', space=vmem, size = 0x1000, scoped, tag = 'input window, operand 0, single buffered']
    #allocation4 [shape = 's32[1]{0}', space=sflag, size = 0x4, scoped, tag = 'scoped memory for tpu_custom_call.1']
    #allocation5 [shape = 's32[1]{0}', space=sflag, size = 0x4, scoped, tag = 'scoped memory for tpu_custom_call.1']
    #allocation6 [shape = 'u8[12288]{0}', space=vmem, size = 0x3000, scoped, tag = 'output window, operand 0, single buffered']
    %6 = vsyncpa [#allocation4], 0
    %7 = vsyncpa [#allocation5], 0
    // Predicated region
    $region2: #{tpu_custom_call.1} parent=1 // pred_check
      _
    $region3: #{tpu_custom_call.1} parent=1 // pred_check_branch
      %9 = sbr.rel (0) target = $region5
    $region4: #{tpu_custom_call.1} parent=1 // pred_region
      %11 = vsyncadd [#allocation4], 0
      %s13 = sshll.u32 %s0, 4
      %s14 = int_to_ptr.hbm [resolvable:$true] %s13
      %s15 = sshll.u32 [#allocation3], 4
      %s16 = int_to_ptr.vmem [resolvable:$true] %s15
      %18 = dma.hbm_to_vmem [thread:$0]  %s14, 128, %s16, [#allocation4]
    $region5: #{tpu_custom_call.1} parent=1 // pred_fallthru
      _
    // Predicated region
    $region6: #{tpu_custom_call.1} parent=1 // pred_check
      _
    $region7: #{tpu_custom_call.1} parent=1 // pred_check_branch
      %20 = sbr.rel (0) target = $region9
    $region8: #{tpu_custom_call.1} parent=1 // pred_region
      %22 = dma.done [#allocation4], 128
    $region9: #{tpu_custom_call.1} parent=1 // pred_fallthru
      _
    %v23 = vlaneseq
    %v24 = vand.u32 %v23, 127
    %v25 = vand.u32 %v24, 1
    %vm26 = vcmp.eq.s32.totalorder %v25, 0
    %v27 = vsel %vm26, 1.0, -1.0
    %v28 = vsub.f32 0.0, %v27
    %vm29 = vcmp.lt.s32.totalorder %v24, 0
    %vm30 = vcmp.eq.s32.totalorder %v24, 0
    %vm31 = vcmp.eq.s32.totalorder %v24, 7
    %vm32 = vmor %vm30, %vm31
    %v33 = vld [vmem:[#allocation3] sm:$0xff]
    loop: start=0, step=1, limit=4
    $region10: #{tpu_custom_call.1} parent=1 // loop_pre_header
      _
    $region11: #{tpu_custom_call.1} parent=1 // loop_header
      %s35 = sphi 0, %s39
      %p36 = scmp.ge.s32.totalorder %s35, 4
      %v40 = vphi %v33, %v186
    $region12: #{tpu_custom_call.1} parent=1 // loop_header_branch
      %38 = sbr.rel (%p36) target = $region16
    $region13: #{tpu_custom_call.1} parent=1 // loop_body
      %s41 = smul.u32 %s35, 2
      %42 = vrot.lane.b32.xlu0 %v40, 127
      %v43 = vpop.permute.xlu0 %42
      %44 = vrot.lane.b32.xlu0 %v40, 1
      %v45 = vpop.permute.xlu0 %44
      %v46 = vsel %vm26, %v43, %v45
      %v47 = vmul.f32 %v27, 10.0
      %v48 = vsub.f32 %v46, %v40
      %v49 = vmul.f32 %v47, %v48
      %vm50 = vcmp.lt.f32.partialorder %v49, 0.0
      %v51 = vsel %vm50, -1.0, 1.0
      %v52 = vand.u32 2147483647, %v49
      %vm53 = vcmp.gt.f32.partialorder %v52, 2.4142137
      %vm54 = vcmp.gt.f32.partialorder %v52, 0.41421357
      %vm55 = vmxor %vm53, 1
      %vm56 = vmand %vm54, %vm55
      %v57 = vmax.f32 %v52, 1e-30
      %v58 = vrcp.pop %v57
      %v59 = vmul.f32 %v57, %v58
      %v60 = vsub.f32 1.0, %v59
      %v61 = vmul.f32 %v58, %v60
      %v62 = vadd.f32 %v58, %v61
      %vm63 = vweird.f32 %v57
      %vm64 = vweird.f32 %v58
      %vm65 = vmor %vm63, %vm64
      %v66 = vsel %vm65, %v58, %v62
      %v67 = vand.u32 2147483647, %v57
      %vm68 = vcmp.eq.f32.partialorder %v67, 8.507059e+37
      %v69 = vand.u32 %v57, 2147483648
      %v70 = vor.u32 1.1754944e-38, %v69
      %v71 = vsel %vm68, %v70, %v66
      %v72 = vmul.f32 -1.0, %v71
      %v73 = vsub.f32 %v52, 1.0
      %v74 = vadd.f32 %v52, 1.0
      %v75 = vrcp.pop %v74
      %v76 = vmul.f32 %v74, %v75
      %v77 = vsub.f32 1.0, %v76
      %v78 = vmul.f32 %v75, %v77
      %v79 = vadd.f32 %v75, %v78
      %vm80 = vweird.f32 %v74
      %vm81 = vweird.f32 %v75
      %vm82 = vmor %vm80, %vm81
      %v83 = vsel %vm82, %v75, %v79
      %v84 = vand.u32 2147483647, %v74
      %vm85 = vcmp.eq.f32.partialorder %v84, 8.507059e+37
      %v86 = vand.u32 %v74, 2147483648
      %v87 = vor.u32 1.1754944e-38, %v86
      %v88 = vsel %vm85, %v87, %v83
      %v89 = vmul.f32 %v73, %v88
      %v90 = vsel %vm56, %v89, %v52
      %v91 = vsel %vm53, %v72, %v90
      %v92 = vsel %vm56, 0.7853982, 0.0
      %v93 = vsel %vm53, 1.5707964, %v92
      %v94 = vmul.f32 %v91, %v91
      %v95 = vmul.f32 %v94, 0.080537446
      %v96 = vsub.f32 %v95, 0.13877685
      %v97 = vmul.f32 %v96, %v94
      %v98 = vadd.f32 %v97, 0.19977711
      %v99 = vmul.f32 %v98, %v94
      %v100 = vsub.f32 %v99, 0.3333295
      %v101 = vmul.f32 %v100, %v94
      %v102 = vmul.f32 %v101, %v91
      %v103 = vadd.f32 %v93, %v102
      %v104 = vadd.f32 %v103, %v91
      %v105 = vmul.f32 %v51, %v104
      %v106 = vmul.f32 %v105, 0.31830987
      %v107 = vadd.f32 %v106, 0.5
      %v108 = vsel %vm29, 1.0, %v107
      %v109 = vmul.f32 %v108, %v40
      %v110 = vsub.f32 1.0, %v108
      %v111 = vmul.f32 %v110, %v46
      %v112 = vadd.f32 %v109, %v111
      %s113 = smul.u32 %s41, 8
      %s114 = scalar_lea.vmem [#allocation2], %s113
      %115 = vst [vmem:[%s114] sm:$0xff] %v108
      %116 = vrot.lane.b32.xlu0 %v112, 127
      %v117 = vpop.permute.xlu0 %116
      %118 = vrot.lane.b32.xlu0 %v112, 1
      %v119 = vpop.permute.xlu0 %118
      %v120 = vsel %vm26, %v119, %v117
      %v121 = vmul.f32 %v28, 10.0
      %v122 = vsub.f32 %v120, %v112
      %v123 = vmul.f32 %v121, %v122
      %vm124 = vcmp.lt.f32.partialorder %v123, 0.0
      %v125 = vsel %vm124, -1.0, 1.0
      %v126 = vand.u32 2147483647, %v123
      %vm127 = vcmp.gt.f32.partialorder %v126, 2.4142137
      %vm128 = vcmp.gt.f32.partialorder %v126, 0.41421357
      %vm129 = vmxor %vm127, 1
      %vm130 = vmand %vm128, %vm129
      %v131 = vmax.f32 %v126, 1e-30
      %v132 = vrcp.pop %v131
      %v133 = vmul.f32 %v131, %v132
      %v134 = vsub.f32 1.0, %v133
      %v135 = vmul.f32 %v132, %v134
      %v136 = vadd.f32 %v132, %v135
      %vm137 = vweird.f32 %v131
      %vm138 = vweird.f32 %v132
      %vm139 = vmor %vm137, %vm138
      %v140 = vsel %vm139, %v132, %v136
      %v141 = vand.u32 2147483647, %v131
      %vm142 = vcmp.eq.f32.partialorder %v141, 8.507059e+37
      %v143 = vand.u32 %v131, 2147483648
      %v144 = vor.u32 1.1754944e-38, %v143
      %v145 = vsel %vm142, %v144, %v140
      %v146 = vmul.f32 -1.0, %v145
      %v147 = vsub.f32 %v126, 1.0
      %v148 = vadd.f32 %v126, 1.0
      %v149 = vrcp.pop %v148
      %v150 = vmul.f32 %v148, %v149
      %v151 = vsub.f32 1.0, %v150
      %v152 = vmul.f32 %v149, %v151
      %v153 = vadd.f32 %v149, %v152
      %vm154 = vweird.f32 %v148
      %vm155 = vweird.f32 %v149
      %vm156 = vmor %vm154, %vm155
      %v157 = vsel %vm156, %v149, %v153
      %v158 = vand.u32 2147483647, %v148
      %vm159 = vcmp.eq.f32.partialorder %v158, 8.507059e+37
      %v160 = vand.u32 %v148, 2147483648
      %v161 = vor.u32 1.1754944e-38, %v160
      %v162 = vsel %vm159, %v161, %v157
      %v163 = vmul.f32 %v147, %v162
      %v164 = vsel %vm130, %v163, %v126
      %v165 = vsel %vm127, %v146, %v164
      %v166 = vsel %vm130, 0.7853982, 0.0
      %v167 = vsel %vm127, 1.5707964, %v166
      %v168 = vmul.f32 %v165, %v165
      %v169 = vmul.f32 %v168, 0.080537446
      %v170 = vsub.f32 %v169, 0.13877685
      %v171 = vmul.f32 %v170, %v168
      %v172 = vadd.f32 %v171, 0.19977711
      %v173 = vmul.f32 %v172, %v168
      %v174 = vsub.f32 %v173, 0.3333295
      %v175 = vmul.f32 %v174, %v168
      %v176 = vmul.f32 %v175, %v165
      %v177 = vadd.f32 %v167, %v176
      %v178 = vadd.f32 %v177, %v165
      %v179 = vmul.f32 %v125, %v178
      %v180 = vmul.f32 %v179, 0.31830987
      %v181 = vadd.f32 %v180, 0.5
      %v182 = vsel %vm32, 1.0, %v181
      %v183 = vmul.f32 %v182, %v112
      %v184 = vsub.f32 1.0, %v182
      %v185 = vmul.f32 %v184, %v120
      %v186 = vadd.f32 %v183, %v185
      %s187 = sadd.s32 %s41, 1
      %s188 = smul.u32 %s187, 8
      %s189 = scalar_lea.vmem [#allocation2], %s188
      %190 = vst [vmem:[%s189] sm:$0xff] %v182
    $region14: #{tpu_custom_call.1} parent=1 // loop_footer
      %s39 = sadd.s32 1, %s35
    $region15: #{tpu_custom_call.1} parent=1 // loop_footer_branch
      %34 = sbr.rel target = $region11
    $region16: #{tpu_custom_call.1} parent=1 // loop_exit
      _
    %vm191 = vcmp.eq.s32.totalorder %v24, 5
    %v192 = vsel %vm191, 1.0, 0.0
    %vm193 = vcmp.eq.s32.totalorder %v24, 6
    %v194 = vsel %vm193, 1.0, 0.0
    %v195 = vsel %vm31, 1.0, 0.0
    loop: start=0, step=1, limit=4
    $region17: #{tpu_custom_call.1} parent=1 // loop_pre_header
      _
    $region18: #{tpu_custom_call.1} parent=1 // loop_header
      %s197 = sphi 0, %s201
      %p198 = scmp.ge.s32.totalorder %s197, 4
      %v202 = vphi %v192, %v275
      %v203 = vphi %v194, %v276
      %v204 = vphi %v195, %v277
    $region19: #{tpu_custom_call.1} parent=1 // loop_header_branch
      %200 = sbr.rel (%p198) target = $region23
    $region20: #{tpu_custom_call.1} parent=1 // loop_body
      %s205 = ssub.s32 3, %s197
      %s206 = smul.u32 %s205, 2
      %s207 = sadd.s32 %s206, 1
      %s208 = smul.u32 %s207, 8
      %s209 = scalar_lea.vmem [#allocation2], %s208
      %v210 = vld [vmem:[%s209] sm:$0xff]
      %211 = vrot.lane.b32.xlu0 %v210, 127
      %v212 = vpop.permute.xlu0 %211
      %213 = vrot.lane.b32.xlu0 %v210, 1
      %v214 = vpop.permute.xlu0 %213
      %v215 = vsel %vm26, %v214, %v212
      %v216 = vsub.f32 1.0, %v215
      %v217 = vsel %vm32, 0.0, %v216
      %218 = vrot.lane.b32.xlu0 %v202, 127
      %v219 = vpop.permute.xlu0 %218
      %220 = vrot.lane.b32.xlu0 %v203, 127
      %v221 = vpop.permute.xlu0 %220
      %222 = vrot.lane.b32.xlu0 %v204, 127
      %v223 = vpop.permute.xlu0 %222
      %224 = vrot.lane.b32.xlu0 %v202, 1
      %v225 = vpop.permute.xlu0 %224
      %226 = vrot.lane.b32.xlu0 %v203, 1
      %v227 = vpop.permute.xlu0 %226
      %228 = vrot.lane.b32.xlu0 %v204, 1
      %v229 = vpop.permute.xlu0 %228
      %v230 = vsel %vm26, 1, 0
      %vm231 = vcmp.eq.s32.totalorder %v230, 1
      %v232 = vsel %vm231, %v225, %v219
      %v233 = vsel %vm231, %v227, %v221
      %v234 = vsel %vm231, %v229, %v223
      %v235 = vmul.f32 %v210, %v202
      %v236 = vmul.f32 %v210, %v203
      %v237 = vmul.f32 %v210, %v204
      %v238 = vmul.f32 %v217, %v232
      %v239 = vmul.f32 %v217, %v233
      %v240 = vmul.f32 %v217, %v234
      %v241 = vadd.f32 %v235, %v238
      %v242 = vadd.f32 %v236, %v239
      %v243 = vadd.f32 %v237, %v240
      %s244 = smul.u32 %s206, 8
      %s245 = scalar_lea.vmem [#allocation2], %s244
      %v246 = vld [vmem:[%s245] sm:$0xff]
      %247 = vrot.lane.b32.xlu0 %v246, 127
      %v248 = vpop.permute.xlu0 %247
      %249 = vrot.lane.b32.xlu0 %v246, 1
      %v250 = vpop.permute.xlu0 %249
      %v251 = vsel %vm26, %v248, %v250
      %v252 = vsub.f32 1.0, %v251
      %v253 = vsel %vm29, 0.0, %v252
      %254 = vrot.lane.b32.xlu0 %v241, 127
      %v255 = vpop.permute.xlu0 %254
      %256 = vrot.lane.b32.xlu0 %v242, 127
      %v257 = vpop.permute.xlu0 %256
      %258 = vrot.lane.b32.xlu0 %v243, 127
      %v259 = vpop.permute.xlu0 %258
      %260 = vrot.lane.b32.xlu0 %v241, 1
      %v261 = vpop.permute.xlu0 %260
      %262 = vrot.lane.b32.xlu0 %v242, 1
      %v263 = vpop.permute.xlu0 %262
      %264 = vrot.lane.b32.xlu0 %v243, 1
      %v265 = vpop.permute.xlu0 %264
      %v266 = vsel %vm231, %v255, %v261
      %v267 = vsel %vm231, %v257, %v263
      %v268 = vsel %vm231, %v259, %v265
      %v269 = vmul.f32 %v246, %v241
      %v270 = vmul.f32 %v246, %v242
      %v271 = vmul.f32 %v246, %v243
      %v272 = vmul.f32 %v253, %v266
      %v273 = vmul.f32 %v253, %v267
      %v274 = vmul.f32 %v253, %v268
      %v275 = vadd.f32 %v269, %v272
      %v276 = vadd.f32 %v270, %v273
      %v277 = vadd.f32 %v271, %v274
    $region21: #{tpu_custom_call.1} parent=1 // loop_footer
      %s201 = sadd.s32 1, %s197
    $region22: #{tpu_custom_call.1} parent=1 // loop_footer_branch
      %196 = sbr.rel target = $region18
    $region23: #{tpu_custom_call.1} parent=1 // loop_exit
      _
    %278 = vst [vmem:[#allocation6] sm:$0xff] %v202
    %279 = vst [vmem:[#allocation6 + $0x8] sm:$0xff] %v203
    %280 = vst [vmem:[#allocation6 + $0x10] sm:$0xff] %v204
    // Predicated region
    $region24: #{tpu_custom_call.1} parent=1 // pred_check
      _
    $region25: #{tpu_custom_call.1} parent=1 // pred_check_branch
      %282 = sbr.rel (0) target = $region27
    $region26: #{tpu_custom_call.1} parent=1 // pred_region
      %284 = vsyncadd [#allocation5], 0
      %s285 = sshll.u32 [#allocation6], 4
      %s286 = int_to_ptr.vmem [resolvable:$true] %s285
      %s287 = sshll.u32 %s1, 4
      %s288 = int_to_ptr.hbm [resolvable:$true] %s287
      %293 = dma.vmem_to_hbm [thread:$0]  %s286, 384, %s288, [#allocation5], 128, 128, 8
    $region27: #{tpu_custom_call.1} parent=1 // pred_fallthru
      _
    // Predicated region
    $region28: #{tpu_custom_call.1} parent=1 // pred_check
      _
    $region29: #{tpu_custom_call.1} parent=1 // pred_check_branch
      %295 = sbr.rel (0) target = $region31
    $region30: #{tpu_custom_call.1} parent=1 // pred_region
      %297 = dma.done [#allocation5], 384
    $region31: #{tpu_custom_call.1} parent=1 // pred_fallthru
      _
    %298 = vsyncpa [#allocation4], 1
    %299 = vsyncpa [#allocation5], 1

</llo_original>
